<compile_context>
chip_gen: v5e
topology: v5e:2x2
jax: 0.10.0
libtpu: 0.0.40
codegen_flags: <defaults>
</compile_context>

<pallas_src>
import jax
import jax.numpy as jnp
from jax.experimental import pallas as pl
from jax.experimental.pallas import tpu as pltpu

_EPS_SQ = 1e-24  # rsqrt(max(sum(x*x), eps^2)) ~= 1 / max(||x||, 1e-12)  (F.normalize)

_HAS_BUFFERED = hasattr(pl, "Buffered")


def _round_up(x, m):
    return (x + m - 1) // m * m


def _pad2(x, rows, cols):
    return jnp.pad(x, ((0, rows - x.shape[0]), (0, cols - x.shape[1])))


def _vmem_cap_bytes():
    """Generation-aware VMEM budget (~80% of physical; 128 MiB fallback)."""
    try:
        cap = int(pltpu.get_tpu_info().vmem_capacity_bytes)
    except Exception:
        cap = 128 << 20
    return int(cap * 4 // 5)


# ----------------------------------------------------------------------------------
# Kernel 1: class side, runs ONCE.  pc^T = transpose(L2norm(h_c @ w_cls + b_cls))
# ----------------------------------------------------------------------------------
def _class_proj_kernel(hc_ref, wc_ref, bc_ref, pcT_ref):
    pc = jnp.dot(hc_ref[...], wc_ref[...], preferred_element_type=jnp.float32)
    pc = pc + bc_ref[...]
    inv_c = jax.lax.rsqrt(
        jnp.maximum(jnp.sum(pc * pc, axis=-1, keepdims=True), _EPS_SQ))
    # one-time f32 transpose (XLU); amortized over every step of the main grid
    pcT_ref[...] = jnp.transpose(pc * inv_c).astype(pcT_ref.dtype)


def _project_classes(h_c, w_cls, b_cls, *, C_pad, Dc_pad, H_pad, compute_dtype, vmem_cap):
    hc_p = _pad2(h_c.astype(compute_dtype), C_pad, Dc_pad)
    wc_p = _pad2(w_cls.astype(compute_dtype), Dc_pad, H_pad)
    bc_p = _pad2(jnp.asarray(b_cls, jnp.float32).reshape(1, -1), 1, H_pad)

    itemsize = jnp.dtype(compute_dtype).itemsize
    est = 2 * ((C_pad * Dc_pad + Dc_pad * H_pad + H_pad * C_pad) * itemsize + H_pad * 4) \
        + C_pad * H_pad * 4
    vmem_limit = int(min(max(est + (2 << 20), 32 << 20), vmem_cap))

    grid_spec = pltpu.PrefetchScalarGridSpec(
        num_scalar_prefetch=0,
        grid=(1,),
        in_specs=[
            pl.BlockSpec((C_pad, Dc_pad), lambda i: (0, 0)),
            pl.BlockSpec((Dc_pad, H_pad), lambda i: (0, 0)),
            pl.BlockSpec((1, H_pad), lambda i: (0, 0)),
        ],
        out_specs=pl.BlockSpec((H_pad, C_pad), lambda i: (0, 0)),
    )
    return pl.pallas_call(
        _class_proj_kernel,
        out_shape=jax.ShapeDtypeStruct((H_pad, C_pad), compute_dtype),
        grid_spec=grid_spec,
        compiler_params=pltpu.CompilerParams(
            dimension_semantics=("arbitrary",), vmem_limit_bytes=vmem_limit),
    )(hc_p, wc_p, bc_p)


# ----------------------------------------------------------------------------------
# Kernel 2: text side + logits, gridded over B (and optionally C).
# ----------------------------------------------------------------------------------
def _logits_kernel_single(scale_ref, hx_ref, wt_ref, bt_ref, pcT_ref, logits_ref):
    """One B tile, single resident C tile (common case).  Grid = (n_b,), 'parallel'."""
    px = jnp.dot(hx_ref[...], wt_ref[...], preferred_element_type=jnp.float32)
    px = px + bt_ref[...]
    inv_x = jax.lax.rsqrt(
        jnp.maximum(jnp.sum(px * px, axis=-1, keepdims=True), _EPS_SQ))
    px = (px * inv_x).astype(pcT_ref.dtype)
    logits = jnp.dot(px, pcT_ref[...], preferred_element_type=jnp.float32)
    # exp(temperature) applied to f32 logits AFTER the matmul (matches PyTorch rounding)
    logits_ref[...] = (logits * scale_ref[0]).astype(logits_ref.dtype)


def _logits_kernel_ctiled(scale_ref, hx_ref, wt_ref, bt_ref, pcT_ref, logits_ref, px_ref):
    """Grid = (n_b, n_c); px computed once per B tile (j==0) into a VMEM scratch."""
    @pl.when(pl.program_id(1) == 0)
    def _():
        px = jnp.dot(hx_ref[...], wt_ref[...], preferred_element_type=jnp.float32)
        px = px + bt_ref[...]
        inv_x = jax.lax.rsqrt(
            jnp.maximum(jnp.sum(px * px, axis=-1, keepdims=True), _EPS_SQ))
        px_ref[...] = (px * inv_x).astype(px_ref.dtype)

    logits = jnp.dot(px_ref[...], pcT_ref[...], preferred_element_type=jnp.float32)
    logits_ref[...] = (logits * scale_ref[0]).astype(logits_ref.dtype)


def class_attention_forward(h_x, h_c, w_txt, b_txt, w_cls, b_cls, temperature, *,
                            tile_b=256, tile_c=None,
                            compute_dtype=jnp.bfloat16, logits_dtype=jnp.float32,
                            scale_attention=False):
    """Fused ClassAttentionModel hot path on TPU via Pallas.

    h_x: [B, Dx] text CLS embeddings     w_txt: [Dx, H]  b_txt: [H]
    h_c: [C, Dc] class CLS embeddings    w_cls: [Dc, H]  b_cls: [H]
    Returns logits [B, C] in `logits_dtype`.
    """
    B, Dx = h_x.shape
    C, Dc = h_c.shape
    H = w_txt.shape[1]

    itemsize = jnp.dtype(compute_dtype).itemsize
    out_itemsize = jnp.dtype(logits_dtype).itemsize
    vmem_cap = _vmem_cap_bytes()

    Dx_pad = _round_up(Dx, 128)
    Dc_pad = _round_up(Dc, 128)
    H_pad = _round_up(H, 128)

    # ---- B tiling: align to the sublane packing width of compute_dtype ----
    # f32 -> 8 rows/vreg, bf16 -> 16, int8/fp8 -> 32  (fully packed vregs, unmasked vst)
    row_align = 8 * max(1, 4 // itemsize)
    tile_b = _round_up(max(row_align, min(tile_b, _round_up(B, row_align))), row_align)
    B_pad = _round_up(B, tile_b)
    n_b = B_pad // tile_b

    # ---- C tiling: keep pc^T fully resident when small; tile C for huge class sets ----
    C_pad = _round_up(C, 128)
    if tile_c is None:
        tile_c = C_pad if C_pad * H_pad * itemsize <= (8 << 20) else 1024
    tile_c = _round_up(min(max(tile_c, 128), C_pad), 128)
    C_pad = _round_up(C, tile_c)
    n_c = C_pad // tile_c

    # ---- class side: project + normalize + transpose ONCE (tiny separate pallas_call) ----
    pcT = _project_classes(h_c, w_cls, b_cls, C_pad=C_pad, Dc_pad=Dc_pad, H_pad=H_pad,
                           compute_dtype=compute_dtype, vmem_cap=vmem_cap)

    hx_p = _pad2(h_x.astype(compute_dtype), B_pad, Dx_pad)
    wt_p = _pad2(w_txt.astype(compute_dtype), Dx_pad, H_pad)
    bt_p = _pad2(jnp.asarray(b_txt, jnp.float32).reshape(1, -1), 1, H_pad)

    # exp(temperature) (and optional 1/sqrt(n_classes)) hoisted to an SMEM scalar
    scale = jnp.exp(jnp.asarray(temperature, jnp.float32))
    if scale_attention:
        scale = scale * jnp.float32(C) ** -0.5
    scale = scale.reshape((1,))

    flops = 2 * (B_pad * Dx_pad * H_pad + B_pad * C_pad * H_pad)
    bytes_accessed = ((B_pad * Dx_pad + Dx_pad * H_pad + H_pad * C_pad) * itemsize
                      + H_pad * 4 + B_pad * C_pad * out_itemsize)
    cost = pl.CostEstimate(flops=int(flops), transcendentals=int(B_pad),
                           bytes_accessed=int(bytes_accessed))

    def build(buffered_residents):
        res_bufs = 1 if buffered_residents else 2

        def resident(shape, index_map):
            if buffered_residents:
                # grid-invariant block: no need for two pipeline buffers
                return pl.BlockSpec(shape, index_map, pipeline_mode=pl.Buffered(1))
            return pl.BlockSpec(shape, index_map)

        if n_c == 1:
            kernel = _logits_kernel_single
            grid = (n_b,)
            in_specs = [
                pl.BlockSpec(memory_space=pltpu.MemorySpace.SMEM),       # scale
                pl.BlockSpec((tile_b, Dx_pad), lambda i: (i, 0)),         # h_x tile
                resident((Dx_pad, H_pad), lambda i: (0, 0)),              # w_txt
                resident((1, H_pad), lambda i: (0, 0)),                   # b_txt
                resident((H_pad, C_pad), lambda i: (0, 0)),               # pc^T (resident)
            ]
            out_specs = pl.BlockSpec((tile_b, C_pad), lambda i: (i, 0))   # lane-dense
            scratch_shapes = []
            dims = ("parallel",)                                          # v7x megacore OK
            pcT_bufs = res_bufs
            px_scratch = 0
        else:
            kernel = _logits_kernel_ctiled
            grid = (n_b, n_c)
            in_specs = [
                pl.BlockSpec(memory_space=pltpu.MemorySpace.SMEM),
                pl.BlockSpec((tile_b, Dx_pad), lambda i, j: (i, 0)),
                resident((Dx_pad, H_pad), lambda i, j: (0, 0)),
                resident((1, H_pad), lambda i, j: (0, 0)),
                pl.BlockSpec((H_pad, tile_c), lambda i, j: (0, j)),       # pc^T C tile
            ]
            out_specs = pl.BlockSpec((tile_b, tile_c), lambda i, j: (i, j))
            scratch_shapes = [pltpu.VMEM((tile_b, H_pad), compute_dtype)]  # normalized px
            dims = ("parallel", "arbitrary")   # px-once scratch needs serial C order only
            pcT_bufs = 2
            px_scratch = tile_b * H_pad * itemsize

        # per-step tiles double-buffered; grid-invariant residents counted once
        vmem_est = (2 * tile_b * Dx_pad * itemsize
                    + 2 * tile_b * tile_c * out_itemsize
                    + res_bufs * (Dx_pad * H_pad * itemsize + H_pad * 4)
                    + pcT_bufs * H_pad * tile_c * itemsize
                    + px_scratch)
        vmem_limit = int(min(max(vmem_est + (2 << 20), 32 << 20), vmem_cap))

        grid_spec = pltpu.PrefetchScalarGridSpec(
            num_scalar_prefetch=0, grid=grid, in_specs=in_specs,
            out_specs=out_specs, scratch_shapes=scratch_shapes)

        return pl.pallas_call(
            kernel,
            out_shape=jax.ShapeDtypeStruct((B_pad, C_pad), logits_dtype),
            grid_spec=grid_spec,
            compiler_params=pltpu.CompilerParams(
                dimension_semantics=dims, vmem_limit_bytes=vmem_limit),
            cost_estimate=cost,
        )

    args = (scale, hx_p, wt_p, bt_p, pcT)
    if _HAS_BUFFERED:
        try:
            out = build(True)(*args)
        except Exception:
            # pipeline_mode=pl.Buffered(1) unsupported on this jax build -> default buffering
            out = build(False)(*args)
    else:
        out = build(False)(*args)

    # dropout_logits is p=0.0 at eval -> identity
    return out[:B, :C]


# ----------------------------------------------------------------------------------
# Glue: synthetic stand-in for external transformer encoders + pure-JAX reference.
# ----------------------------------------------------------------------------------
def synthetic_encoder(input_ids, emb_table, pos_table, w_enc, b_enc):
    """Stand-in for txt_encoder / cls_encoder; returns hidden_states[-1] [rows, seq, D]."""
    h = emb_table[input_ids] + pos_table[: input_ids.shape[1]][None, :, :]
    h = jnp.tanh(h @ w_enc + b_enc)
    return h


def _reference_logits(h_x, h_c, w_txt, b_txt, w_cls, b_cls, temperature,
                      compute_dtype=jnp.bfloat16):
    """Pure-JAX reference following the same bf16-input / f32-accumulate recipe."""
    cdt = compute_dtype
    px = jnp.dot(h_x.astype(cdt), w_txt.astype(cdt),
                 preferred_element_type=jnp.float32) + b_txt[None, :]
    pc = jnp.dot(h_c.astype(cdt), w_cls.astype(cdt),
                 preferred_element_type=jnp.float32) + b_cls[None, :]
    inv_x = jax.lax.rsqrt(jnp.maximum(jnp.sum(px * px, -1, keepdims=True), _EPS_SQ))
    inv_c = jax.lax.rsqrt(jnp.maximum(jnp.sum(pc * pc, -1, keepdims=True), _EPS_SQ))
    px = (px * inv_x).astype(cdt)
    pc = (pc * inv_c).astype(cdt)
    logits = jax.lax.dot_general(px, pc, (((1,), (1,)), ((), ())),
                                 preferred_element_type=jnp.float32)
    return logits * jnp.exp(jnp.asarray(temperature, jnp.float32))


if __name__ == "__main__":
    # Small, deterministic problem sizes
    B, C = 40, 7          # batch_size, n_classes
    T_x, T_c = 8, 4       # text_seq_len, class_seq_len
    D_enc = 32            # encoder output hidden size
    H = 32                # projection hidden size (kwargs['hidden_size'])
    V = 64                # synthetic vocab size
    temperature = 0.1     # initial_temperature (not learned)

    key = jax.random.PRNGKey(0)
    keys = jax.random.split(key, 10)

    # synthetic encoder parameters (deterministic)
    emb = jax.random.normal(keys[0], (V, D_enc), jnp.float32) * 0.02
    pos = jax.random.normal(keys[1], (16, D_enc), jnp.float32) * 0.02
    w_enc = jax.random.normal(keys[2], (D_enc, D_enc), jnp.float32) / jnp.sqrt(D_enc)
    b_enc = jnp.zeros((D_enc,), jnp.float32)

    # ClassAttentionModel parameters: txt_out / cls_out Linear layers (stored [in, out])
    w_txt = jax.random.normal(keys[3], (D_enc, H), jnp.float32) / jnp.sqrt(D_enc)
    b_txt = jax.random.normal(keys[4], (H,), jnp.float32) * 0.01
    w_cls = jax.random.normal(keys[5], (D_enc, H), jnp.float32) / jnp.sqrt(D_enc)
    b_cls = jax.random.normal(keys[6], (H,), jnp.float32) * 0.01

    # forward() inputs: text_input['input_ids'], labels_input['input_ids']
    text_ids = jax.random.randint(keys[7], (B, T_x), 0, V)
    label_ids = jax.random.randint(keys[8], (C, T_c), 0, V)

    # embed_texts_and_labels: run encoders, take hidden_states[-1][:, 0] (CLS token)
    h_x = synthetic_encoder(text_ids, emb, pos, w_enc, b_enc)[:, 0]   # [B, D_enc]
    h_c = synthetic_encoder(label_ids, emb, pos, w_enc, b_enc)[:, 0]  # [C, D_enc]

    # --- path 1: multi B-tile "parallel" grid, single resident pc^T tile (common case) ---
    logits = class_attention_forward(h_x, h_c, w_txt, b_txt, w_cls, b_cls,
                                     temperature, tile_b=16)
    logits = jax.block_until_ready(logits)
    ref = _reference_logits(h_x, h_c, w_txt, b_txt, w_cls, b_cls, temperature)
    assert logits.shape == (B, C), logits.shape
    assert jnp.allclose(logits, ref, atol=5e-3, rtol=5e-3), (logits, ref)

    # --- path 2: many classes -> C axis tiled as well (grid = (n_b, n_c)) ---
    C_big = 150
    label_ids_big = jax.random.randint(keys[9], (C_big, T_c), 0, V)
    h_c_big = synthetic_encoder(label_ids_big, emb, pos, w_enc, b_enc)[:, 0]
    logits_big = class_attention_forward(h_x, h_c_big, w_txt, b_txt, w_cls, b_cls,
                                         temperature, tile_b=16, tile_c=128)
    logits_big = jax.block_until_ready(logits_big)
    ref_big = _reference_logits(h_x, h_c_big, w_txt, b_txt, w_cls, b_cls, temperature)
    assert logits_big.shape == (B, C_big), logits_big.shape
    assert jnp.allclose(logits_big, ref_big, atol=5e-3, rtol=5e-3), (logits_big, ref_big)

    # TODO(synk): cross_attention_layers (ClassTransformerBlock) path not implemented
    # (disabled by default in the module's kwargs); learn_temperature clamp is a
    # training-time parameter update and is out of scope for the forward kernel.
    print("KERNEL_OK")
</pallas_src>

<mosaic_0001>
module attributes {stable_mosaic.version = 11 : i64} {
  func.func @_class_proj_kernel(%arg0: i32, %arg1: memref<128x128xbf16, #tpu.memory_space<vmem>>, %arg2: memref<128x128xbf16, #tpu.memory_space<vmem>>, %arg3: memref<1x128xf32, #tpu.memory_space<vmem>>, %arg4: memref<128x128xbf16, #tpu.memory_space<vmem>>) attributes {dimension_semantics = [#tpu.dimension_semantics<arbitrary>], iteration_bounds = array<i64: 1>, scalar_prefetch = 0 : i64, scratch_operands = 0 : i64, tpu.core_type = #tpu.core_type<tc>, window_params = [{pipeline_mode = #tpu.pipeline_mode<synchronous>, transform_indices = @transform_0, window_bounds = array<i64: 128, 128>}, {pipeline_mode = #tpu.pipeline_mode<synchronous>, transform_indices = @transform_1, window_bounds = array<i64: 128, 128>}, {pipeline_mode = #tpu.pipeline_mode<synchronous>, transform_indices = @transform_2, window_bounds = array<i64: 1, 128>}, {pipeline_mode = #tpu.pipeline_mode<synchronous>, transform_indices = @transform_3, window_bounds = array<i64: 128, 128>}]} {
    %c0 = arith.constant 0 : index
    %c0_0 = arith.constant 0 : index
    %0 = vector.load %arg1[%c0, %c0_0] : memref<128x128xbf16, #tpu.memory_space<vmem>>, vector<128x128xbf16>
    %c0_1 = arith.constant 0 : index
    %c0_2 = arith.constant 0 : index
    %1 = vector.load %arg2[%c0_1, %c0_2] : memref<128x128xbf16, #tpu.memory_space<vmem>>, vector<128x128xbf16>
    %cst = arith.constant dense<0.000000e+00> : vector<128x128xf32>
    %2 = tpu.matmul %0, %1, %cst {dimension_numbers = #tpu.dot_dimension_numbers<[1], [0], [0], [1], [0, 0, 1, 1], [], []>} : vector<128x128xbf16>, vector<128x128xbf16>, vector<128x128xf32> -> vector<128x128xf32>
    %c0_3 = arith.constant 0 : index
    %c0_4 = arith.constant 0 : index
    %3 = vector.load %arg3[%c0_3, %c0_4] : memref<1x128xf32, #tpu.memory_space<vmem>>, vector<1x128xf32>
    %4 = vector.broadcast %3 : vector<1x128xf32> to vector<128x128xf32>
    %5 = arith.addf %2, %4 : vector<128x128xf32>
    %6 = arith.mulf %5, %5 : vector<128x128xf32>
    %cst_5 = arith.constant dense<0.000000e+00> : vector<128xf32>
    %7 = vector.multi_reduction <add>, %6, %cst_5 [1] : vector<128x128xf32> to vector<128xf32>
    %8 = vector.shape_cast %7 : vector<128xf32> to vector<128x1xf32>
    %cst_6 = arith.constant 1.000000e-24 : f32
    %9 = vector.broadcast %cst_6 : f32 to vector<128x1xf32>
    %10 = arith.maximumf %8, %9 : vector<128x1xf32>
    %11 = math.rsqrt %10 : vector<128x1xf32>
    %12 = vector.broadcast %11 : vector<128x1xf32> to vector<128x128xf32>
    %13 = arith.mulf %5, %12 : vector<128x128xf32>
    %14 = tpu.transpose %13, [1, 0] : vector<128x128xf32> -> vector<128x128xf32>
    %15 = arith.truncf %14 : vector<128x128xf32> to vector<128x128xbf16>
    %c0_7 = arith.constant 0 : index
    %c0_8 = arith.constant 0 : index
    %16 = vector.load %arg4[%c0_7, %c0_8] : memref<128x128xbf16, #tpu.memory_space<vmem>>, vector<128x128xbf16>
    tpu.vector_store %arg4[%c0_7, %c0_8], %15 {strides = array<i32>} : memref<128x128xbf16, #tpu.memory_space<vmem>>, vector<128x128xbf16>,
    return
  }
  func.func @transform_0(%arg0: i32) -> (i32, i32) {
    %c0_i32 = arith.constant 0 : i32
    %c0_i32_0 = arith.constant 0 : i32
    %c0_i32_1 = arith.constant 0 : i32
    return %c0_i32, %c0_i32_0 : i32, i32
  }
  func.func @transform_1(%arg0: i32) -> (i32, i32) {
    %c0_i32 = arith.constant 0 : i32
    %c0_i32_0 = arith.constant 0 : i32
    %c0_i32_1 = arith.constant 0 : i32
    return %c0_i32, %c0_i32_0 : i32, i32
  }
  func.func @transform_2(%arg0: i32) -> (i32, i32) {
    %c0_i32 = arith.constant 0 : i32
    %c0_i32_0 = arith.constant 0 : i32
    %c0_i32_1 = arith.constant 0 : i32
    return %c0_i32, %c0_i32_0 : i32, i32
  }
  func.func @transform_3(%arg0: i32) -> (i32, i32) {
    %c0_i32 = arith.constant 0 : i32
    %c0_i32_0 = arith.constant 0 : i32
    %c0_i32_1 = arith.constant 0 : i32
    return %c0_i32, %c0_i32_0 : i32, i32
  }
}

</mosaic_0001>

<llo_original>
// kernel: tpu_custom_call.1
$region0: #{tpu_custom_call.1}
  #allocation0 [shape = 'u32[]', space=smem, size = 0x4, offset = 0x4, fixed_abs, tag = 'smem constant byte address 0x4 - core index']
  #allocation1 [shape = 'u32[72,128]{1,0:T(1,128)}', space=vmem, size = 0x9000, scoped, tag = 'internal scratch']
  %s0 = inlined_call_operand.hbm [shape: bf16[128,128], index: 0, kind: input, shape index: {}]
  %s1 = inlined_call_operand.hbm [shape: bf16[128,128], index: 1, kind: input, shape index: {}]
  %s2 = inlined_call_operand.vmem [shape: f32[1,128], index: 2, kind: input, shape index: {}]
  %s3 = inlined_call_operand.hbm [shape: bf16[128,128], index: 3, kind: output, shape index: {}]
  %s4 = sld [smem:[#allocation0]]
  $region30: #{tpu_custom_call.1} parent=0
    _
  %s6 = ssub.s32 1, %s4
  %s7 = scalar_select 0, %s6, %s4
  $region1: #{tpu_custom_call.1} parent=0
    #allocation2 [shape = 'u8[32768]{0}', space=vmem, size = 0x8000, scoped, tag = 'input window, operand 0, single buffered']
    #allocation3 [shape = 's32[1]{0}', space=sflag, size = 0x4, scoped, tag = 'scoped memory for tpu_custom_call.1']
    #allocation4 [shape = 's32[1]{0}', space=sflag, size = 0x4, scoped, tag = 'scoped memory for tpu_custom_call.1']
    #allocation5 [shape = 'u8[32768]{0}', space=vmem, size = 0x8000, scoped, tag = 'input window, operand 1, single buffered']
    #allocation6 [shape = 's32[1]{0}', space=sflag, size = 0x4, scoped, tag = 'scoped memory for tpu_custom_call.1']
    #allocation7 [shape = 'u8[32768]{0}', space=vmem, size = 0x8000, scoped, tag = 'output window, operand 0, single buffered']
    %8 = vsyncpa [#allocation3], 0
    %9 = vsyncpa [#allocation6], 0
    %10 = vsyncpa [#allocation4], 0
    // Predicated region
    $region2: #{tpu_custom_call.1} parent=1 // pred_check
      _
    $region3: #{tpu_custom_call.1} parent=1 // pred_check_branch
      %12 = sbr.rel (0) target = $region5
    $region4: #{tpu_custom_call.1} parent=1 // pred_region
      %14 = vsyncadd [#allocation3], 0
      %s15 = sshll.u32 %s0, 4
      %s16 = int_to_ptr.hbm [resolvable:$true] %s15
      %s17 = sshll.u32 [#allocation2], 4
      %s18 = int_to_ptr.vmem [resolvable:$true] %s17
      %23 = dma.hbm_to_vmem [thread:$0]  %s16, 1024, %s18, [#allocation3], 64, 64, 4
    $region5: #{tpu_custom_call.1} parent=1 // pred_fallthru
      _
    // Predicated region
    $region6: #{tpu_custom_call.1} parent=1 // pred_check
      _
    $region7: #{tpu_custom_call.1} parent=1 // pred_check_branch
      %25 = sbr.rel (0) target = $region9
    $region8: #{tpu_custom_call.1} parent=1 // pred_region
      %27 = vsyncadd [#allocation6], 0
      %s28 = sshll.u32 %s1, 4
      %s29 = int_to_ptr.hbm [resolvable:$true] %s28
      %s30 = sshll.u32 [#allocation5], 4
      %s31 = int_to_ptr.vmem [resolvable:$true] %s30
      %36 = dma.hbm_to_vmem [thread:$0]  %s29, 1024, %s31, [#allocation6], 64, 64, 4
    $region9: #{tpu_custom_call.1} parent=1 // pred_fallthru
      _
    // Predicated region
    $region10: #{tpu_custom_call.1} parent=1 // pred_check
      _
    $region11: #{tpu_custom_call.1} parent=1 // pred_check_branch
      %38 = sbr.rel (0) target = $region13
    $region12: #{tpu_custom_call.1} parent=1 // pred_region
      _
    $region13: #{tpu_custom_call.1} parent=1 // pred_fallthru
      _
    // Predicated region
    $region14: #{tpu_custom_call.1} parent=1 // pred_check
      _
    $region15: #{tpu_custom_call.1} parent=1 // pred_check_branch
      %40 = sbr.rel (0) target = $region17
    $region16: #{tpu_custom_call.1} parent=1 // pred_region
      %42 = dma.done [#allocation3], 1024
    $region17: #{tpu_custom_call.1} parent=1 // pred_fallthru
      _
    // Predicated region
    $region18: #{tpu_custom_call.1} parent=1 // pred_check
      _
    $region19: #{tpu_custom_call.1} parent=1 // pred_check_branch
      %44 = sbr.rel (0) target = $region21
    $region20: #{tpu_custom_call.1} parent=1 // pred_region
      %46 = dma.done [#allocation6], 1024
    $region21: #{tpu_custom_call.1} parent=1 // pred_fallthru
      _
    %v47 = vld [vmem:[#allocation2] sm:$0xf]
    %v48 = vld [vmem:[#allocation2 + $0x4] sm:$0xf]
    %v49 = vld [vmem:[#allocation2 + $0x8] sm:$0xf]
    %v50 = vld [vmem:[#allocation2 + $0xc] sm:$0xf]
    %v51 = vld [vmem:[#allocation2 + $0x10] sm:$0xf]
    %v52 = vld [vmem:[#allocation2 + $0x14] sm:$0xf]
    %v53 = vld [vmem:[#allocation2 + $0x18] sm:$0xf]
    %v54 = vld [vmem:[#allocation2 + $0x1c] sm:$0xf]
    %v55 = vld [vmem:[#allocation2 + $0x20] sm:$0xf]
    %v56 = vld [vmem:[#allocation2 + $0x24] sm:$0xf]
    %v57 = vld [vmem:[#allocation2 + $0x28] sm:$0xf]
    %v58 = vld [vmem:[#allocation2 + $0x2c] sm:$0xf]
    %v59 = vld [vmem:[#allocation2 + $0x30] sm:$0xf]
    %v60 = vld [vmem:[#allocation2 + $0x34] sm:$0xf]
    %v61 = vld [vmem:[#allocation2 + $0x38] sm:$0xf]
    %v62 = vld [vmem:[#allocation2 + $0x3c] sm:$0xf]
    %v63 = vld [vmem:[#allocation5] sm:$0xf]
    %v64 = vld [vmem:[#allocation5 + $0x4] sm:$0xf]
    %v65 = vld [vmem:[#allocation5 + $0x8] sm:$0xf]
    %v66 = vld [vmem:[#allocation5 + $0xc] sm:$0xf]
    %v67 = vld [vmem:[#allocation5 + $0x10] sm:$0xf]
    %v68 = vld [vmem:[#allocation5 + $0x14] sm:$0xf]
    %v69 = vld [vmem:[#allocation5 + $0x18] sm:$0xf]
    %v70 = vld [vmem:[#allocation5 + $0x1c] sm:$0xf]
    %v71 = vld [vmem:[#allocation5 + $0x20] sm:$0xf]
    %v72 = vld [vmem:[#allocation5 + $0x24] sm:$0xf]
    %v73 = vld [vmem:[#allocation5 + $0x28] sm:$0xf]
    %v74 = vld [vmem:[#allocation5 + $0x2c] sm:$0xf]
    %v75 = vld [vmem:[#allocation5 + $0x30] sm:$0xf]
    %v76 = vld [vmem:[#allocation5 + $0x34] sm:$0xf]
    %v77 = vld [vmem:[#allocation5 + $0x38] sm:$0xf]
    %v78 = vld [vmem:[#allocation5 + $0x3c] sm:$0xf]
    %v79 = vld [vmem:[%s2] sm:$0x1]
    %v81 = vperm.slane %v79, 0
    %v99 = vunpack.c.l.b16 %v47
    %v100 = vunpack.c.l.b16 %v48
    %v101 = vunpack.c.l.b16 %v49
    %v102 = vunpack.c.l.b16 %v50
    %v103 = vunpack.c.l.b16 %v51
    %v104 = vunpack.c.l.b16 %v52
    %v105 = vunpack.c.l.b16 %v53
    %v106 = vunpack.c.l.b16 %v54
    %v107 = vunpack.c.l.b16 %v55
    %v108 = vunpack.c.l.b16 %v56
    %v109 = vunpack.c.l.b16 %v57
    %v110 = vunpack.c.l.b16 %v58
    %v111 = vunpack.c.l.b16 %v59
    %v112 = vunpack.c.l.b16 %v60
    %v113 = vunpack.c.l.b16 %v61
    %v114 = vunpack.c.l.b16 %v62
    %v115 = vpack.c.b16 %v100, %v99
    %v116 = vpack.c.b16 %v102, %v101
    %v117 = vpack.c.b16 %v104, %v103
    %v118 = vpack.c.b16 %v106, %v105
    %v119 = vpack.c.b16 %v108, %v107
    %v120 = vpack.c.b16 %v110, %v109
    %v121 = vpack.c.b16 %v112, %v111
    %v122 = vpack.c.b16 %v114, %v113
    %v147 = vunpack.c.l.b16 %v63
    %v148 = vunpack.c.l.b16 %v64
    %v149 = vunpack.c.l.b16 %v65
    %v150 = vunpack.c.l.b16 %v66
    %v151 = vunpack.c.l.b16 %v67
    %v152 = vunpack.c.l.b16 %v68
    %v153 = vunpack.c.l.b16 %v69
    %v154 = vunpack.c.l.b16 %v70
    %v155 = vunpack.c.l.b16 %v71
    %v156 = vunpack.c.l.b16 %v72
    %v157 = vunpack.c.l.b16 %v73
    %v158 = vunpack.c.l.b16 %v74
    %v159 = vunpack.c.l.b16 %v75
    %v160 = vunpack.c.l.b16 %v76
    %v161 = vunpack.c.l.b16 %v77
    %v162 = vunpack.c.l.b16 %v78
    %v163 = vpack.c.b16 %v148, %v147
    %v164 = vpack.c.b16 %v150, %v149
    %v165 = vpack.c.b16 %v152, %v151
    %v166 = vpack.c.b16 %v154, %v153
    %v167 = vpack.c.b16 %v156, %v155
    %v168 = vpack.c.b16 %v158, %v157
    %v169 = vpack.c.b16 %v160, %v159
    %v170 = vpack.c.b16 %v162, %v161
    %179 = vmatpush.bf16.msra.mxu0 %v170
    %180 = vmatpush.bf16.msra.mxu0 %v169
    %181 = vmatpush.bf16.msra.mxu0 %v168
    %182 = vmatpush.bf16.msra.mxu0 %v167
    %183 = vmatpush.bf16.msra.mxu0 %v166
    %184 = vmatpush.bf16.msra.mxu0 %v165
    %185 = vmatpush.bf16.msra.mxu0 %v164
    %186 = vmatpush.bf16.msra.mxu0 %v163
    %187 = vmatmul.bf16.gmra.mxu0 %v115
    %v188 = vpop.f32.mrf.mxu0
    %v189 = vadd.f32 %v81, %v188
    %v190 = vpop.f32.mrf.mxu0
    %v191 = vadd.f32 %v81, %v190
    %192 = vmatmul.bf16.gmra.mxu0 %v116
    %v193 = vpop.f32.mrf.mxu0
    %v194 = vadd.f32 %v81, %v193
    %v195 = vpop.f32.mrf.mxu0
    %v196 = vadd.f32 %v81, %v195
    %197 = vmatmul.bf16.gmra.mxu0 %v117
    %v198 = vpop.f32.mrf.mxu0
    %v199 = vadd.f32 %v81, %v198
    %v200 = vpop.f32.mrf.mxu0
    %v201 = vadd.f32 %v81, %v200
    %202 = vmatmul.bf16.gmra.mxu0 %v118
    %v203 = vpop.f32.mrf.mxu0
    %v204 = vadd.f32 %v81, %v203
    %v205 = vpop.f32.mrf.mxu0
    %v206 = vadd.f32 %v81, %v205
    %207 = vmatmul.bf16.gmra.mxu0 %v119
    %v208 = vpop.f32.mrf.mxu0
    %v209 = vadd.f32 %v81, %v208
    %v210 = vpop.f32.mrf.mxu0
    %v211 = vadd.f32 %v81, %v210
    %212 = vmatmul.bf16.gmra.mxu0 %v120
    %v213 = vpop.f32.mrf.mxu0
    %v214 = vadd.f32 %v81, %v213
    %v215 = vpop.f32.mrf.mxu0
    %v216 = vadd.f32 %v81, %v215
    %217 = vmatmul.bf16.gmra.mxu0 %v121
    %v218 = vpop.f32.mrf.mxu0
    %v219 = vadd.f32 %v81, %v218
    %v220 = vpop.f32.mrf.mxu0
    %v221 = vadd.f32 %v81, %v220
    %222 = vmatmul.bf16.gmra.mxu0 %v122
    %v223 = vpop.f32.mrf.mxu0
    %v224 = vadd.f32 %v81, %v223
    %v225 = vpop.f32.mrf.mxu0
    %v226 = vadd.f32 %v81, %v225
    %227 = vdwg.mxu0
    %v228 = vmul.f32 %v189, %v189
    %v229 = vmul.f32 %v191, %v191
    %v230 = vmul.f32 %v194, %v194
    %v231 = vmul.f32 %v196, %v196
    %v232 = vmul.f32 %v199, %v199
    %v233 = vmul.f32 %v201, %v201
    %v234 = vmul.f32 %v204, %v204
    %v235 = vmul.f32 %v206, %v206
    %v236 = vmul.f32 %v209, %v209
    %v237 = vmul.f32 %v211, %v211
    %v238 = vmul.f32 %v214, %v214
    %v239 = vmul.f32 %v216, %v216
    %v240 = vmul.f32 %v219, %v219
    %v241 = vmul.f32 %v221, %v221
    %v242 = vmul.f32 %v224, %v224
    %v243 = vmul.f32 %v226, %v226
    %244 = vadd.xlane.f32.xlu0 %v228
    %v245 = vpop.xlane.xlu0 %244
    %246 = vadd.xlane.f32.xlu0 %v229
    %v247 = vpop.xlane.xlu0 %246
    %248 = vadd.xlane.f32.xlu0 %v230
    %v249 = vpop.xlane.xlu0 %248
    %250 = vadd.xlane.f32.xlu0 %v231
    %v251 = vpop.xlane.xlu0 %250
    %252 = vadd.xlane.f32.xlu0 %v232
    %v253 = vpop.xlane.xlu0 %252
    %254 = vadd.xlane.f32.xlu0 %v233
    %v255 = vpop.xlane.xlu0 %254
    %256 = vadd.xlane.f32.xlu0 %v234
    %v257 = vpop.xlane.xlu0 %256
    %258 = vadd.xlane.f32.xlu0 %v235
    %v259 = vpop.xlane.xlu0 %258
    %260 = vadd.xlane.f32.xlu0 %v236
    %v261 = vpop.xlane.xlu0 %260
    %262 = vadd.xlane.f32.xlu0 %v237
    %v263 = vpop.xlane.xlu0 %262
    %264 = vadd.xlane.f32.xlu0 %v238
    %v265 = vpop.xlane.xlu0 %264
    %266 = vadd.xlane.f32.xlu0 %v239
    %v267 = vpop.xlane.xlu0 %266
    %268 = vadd.xlane.f32.xlu0 %v240
    %v269 = vpop.xlane.xlu0 %268
    %270 = vadd.xlane.f32.xlu0 %v241
    %v271 = vpop.xlane.xlu0 %270
    %272 = vadd.xlane.f32.xlu0 %v242
    %v273 = vpop.xlane.xlu0 %272
    %274 = vadd.xlane.f32.xlu0 %v243
    %v275 = vpop.xlane.xlu0 %274
    %v276 = vmax.f32 %v245, 1e-24
    %v277 = vmax.f32 %v247, 1e-24
    %v278 = vmax.f32 %v249, 1e-24
    %v279 = vmax.f32 %v251, 1e-24
    %v280 = vmax.f32 %v253, 1e-24
    %v281 = vmax.f32 %v255, 1e-24
    %v282 = vmax.f32 %v257, 1e-24
    %v283 = vmax.f32 %v259, 1e-24
    %v284 = vmax.f32 %v261, 1e-24
    %v285 = vmax.f32 %v263, 1e-24
    %v286 = vmax.f32 %v265, 1e-24
    %v287 = vmax.f32 %v267, 1e-24
    %v288 = vmax.f32 %v269, 1e-24
    %v289 = vmax.f32 %v271, 1e-24
    %v290 = vmax.f32 %v273, 1e-24
    %v291 = vmax.f32 %v275, 1e-24
    %v292 = vrsqrt.pop %v276
    %v293 = vmul.f32 %v292, %v276
    %v294 = vmul.f32 %v293, %v292
    %v295 = vmul.f32 0.5, %v294
    %v296 = vsub.f32 1.5, %v295
    %v297 = vmul.f32 %v292, %v296
    %vm298 = vweird.f32 %v276
    %vm299 = vweird.f32 %v292
    %vm300 = vmor %vm298, %vm299
    %v301 = vsel %vm300, %v292, %v297
    %v302 = vrsqrt.pop %v277
    %v303 = vmul.f32 %v302, %v277
    %v304 = vmul.f32 %v303, %v302
    %v305 = vmul.f32 0.5, %v304
    %v306 = vsub.f32 1.5, %v305
    %v307 = vmul.f32 %v302, %v306
    %vm308 = vweird.f32 %v277
    %vm309 = vweird.f32 %v302
    %vm310 = vmor %vm308, %vm309
    %v311 = vsel %vm310, %v302, %v307
    %v312 = vrsqrt.pop %v278
    %v313 = vmul.f32 %v312, %v278
    %v314 = vmul.f32 %v313, %v312
    %v315 = vmul.f32 0.5, %v314
    %v316 = vsub.f32 1.5, %v315
    %v317 = vmul.f32 %v312, %v316
    %vm318 = vweird.f32 %v278
    %vm319 = vweird.f32 %v312
    %vm320 = vmor %vm318, %vm319
    %v321 = vsel %vm320, %v312, %v317
    %v322 = vrsqrt.pop %v279
    %v323 = vmul.f32 %v322, %v279
    %v324 = vmul.f32 %v323, %v322
    %v325 = vmul.f32 0.5, %v324
    %v326 = vsub.f32 1.5, %v325
    %v327 = vmul.f32 %v322, %v326
    %vm328 = vweird.f32 %v279
    %vm329 = vweird.f32 %v322
    %vm330 = vmor %vm328, %vm329
    %v331 = vsel %vm330, %v322, %v327
    %v332 = vrsqrt.pop %v280
    %v333 = vmul.f32 %v332, %v280
    %v334 = vmul.f32 %v333, %v332
    %v335 = vmul.f32 0.5, %v334
    %v336 = vsub.f32 1.5, %v335
    %v337 = vmul.f32 %v332, %v336
    %vm338 = vweird.f32 %v280
    %vm339 = vweird.f32 %v332
    %vm340 = vmor %vm338, %vm339
    %v341 = vsel %vm340, %v332, %v337
    %v342 = vrsqrt.pop %v281
    %v343 = vmul.f32 %v342, %v281
    %v344 = vmul.f32 %v343, %v342
    %v345 = vmul.f32 0.5, %v344
    %v346 = vsub.f32 1.5, %v345
    %v347 = vmul.f32 %v342, %v346
    %vm348 = vweird.f32 %v281
    %vm349 = vweird.f32 %v342
    %vm350 = vmor %vm348, %vm349
    %v351 = vsel %vm350, %v342, %v347
    %v352 = vrsqrt.pop %v282
    %v353 = vmul.f32 %v352, %v282
    %v354 = vmul.f32 %v353, %v352
    %v355 = vmul.f32 0.5, %v354
    %v356 = vsub.f32 1.5, %v355
    %v357 = vmul.f32 %v352, %v356
    %vm358 = vweird.f32 %v282
    %vm359 = vweird.f32 %v352
    %vm360 = vmor %vm358, %vm359
    %v361 = vsel %vm360, %v352, %v357
    %v362 = vrsqrt.pop %v283
    %v363 = vmul.f32 %v362, %v283
    %v364 = vmul.f32 %v363, %v362
    %v365 = vmul.f32 0.5, %v364
    %v366 = vsub.f32 1.5, %v365
    %v367 = vmul.f32 %v362, %v366
    %vm368 = vweird.f32 %v283
    %vm369 = vweird.f32 %v362
    %vm370 = vmor %vm368, %vm369
    %v371 = vsel %vm370, %v362, %v367
    %v372 = vrsqrt.pop %v284
    %v373 = vmul.f32 %v372, %v284
    %v374 = vmul.f32 %v373, %v372
    %v375 = vmul.f32 0.5, %v374
    %v376 = vsub.f32 1.5, %v375
    %v377 = vmul.f32 %v372, %v376
    %vm378 = vweird.f32 %v284
    %vm379 = vweird.f32 %v372
    %vm380 = vmor %vm378, %vm379
    %v381 = vsel %vm380, %v372, %v377
    %v382 = vrsqrt.pop %v285
    %v383 = vmul.f32 %v382, %v285
    %v384 = vmul.f32 %v383, %v382
    %v385 = vmul.f32 0.5, %v384
    %v386 = vsub.f32 1.5, %v385
    %v387 = vmul.f32 %v382, %v386
    %vm388 = vweird.f32 %v285
    %vm389 = vweird.f32 %v382
    %vm390 = vmor %vm388, %vm389
    %v391 = vsel %vm390, %v382, %v387
    %v392 = vrsqrt.pop %v286
    %v393 = vmul.f32 %v392, %v286
    %v394 = vmul.f32 %v393, %v392
    %v395 = vmul.f32 0.5, %v394
    %v396 = vsub.f32 1.5, %v395
    %v397 = vmul.f32 %v392, %v396
    %vm398 = vweird.f32 %v286
    %vm399 = vweird.f32 %v392
    %vm400 = vmor %vm398, %vm399
    %v401 = vsel %vm400, %v392, %v397
    %v402 = vrsqrt.pop %v287
    %v403 = vmul.f32 %v402, %v287
    %v404 = vmul.f32 %v403, %v402
    %v405 = vmul.f32 0.5, %v404
    %v406 = vsub.f32 1.5, %v405
    %v407 = vmul.f32 %v402, %v406
    %vm408 = vweird.f32 %v287
    %vm409 = vweird.f32 %v402
    %vm410 = vmor %vm408, %vm409
    %v411 = vsel %vm410, %v402, %v407
    %v412 = vrsqrt.pop %v288
    %v413 = vmul.f32 %v412, %v288
    %v414 = vmul.f32 %v413, %v412
    %v415 = vmul.f32 0.5, %v414
    %v416 = vsub.f32 1.5, %v415
    %v417 = vmul.f32 %v412, %v416
    %vm418 = vweird.f32 %v288
    %vm419 = vweird.f32 %v412
    %vm420 = vmor %vm418, %vm419
    %v421 = vsel %vm420, %v412, %v417
    %v422 = vrsqrt.pop %v289
    %v423 = vmul.f32 %v422, %v289
    %v424 = vmul.f32 %v423, %v422
    %v425 = vmul.f32 0.5, %v424
    %v426 = vsub.f32 1.5, %v425
    %v427 = vmul.f32 %v422, %v426
    %vm428 = vweird.f32 %v289
    %vm429 = vweird.f32 %v422
    %vm430 = vmor %vm428, %vm429
    %v431 = vsel %vm430, %v422, %v427
    %v432 = vrsqrt.pop %v290
    %v433 = vmul.f32 %v432, %v290
    %v434 = vmul.f32 %v433, %v432
    %v435 = vmul.f32 0.5, %v434
    %v436 = vsub.f32 1.5, %v435
    %v437 = vmul.f32 %v432, %v436
    %vm438 = vweird.f32 %v290
    %vm439 = vweird.f32 %v432
    %vm440 = vmor %vm438, %vm439
    %v441 = vsel %vm440, %v432, %v437
    %v442 = vrsqrt.pop %v291
    %v443 = vmul.f32 %v442, %v291
    %v444 = vmul.f32 %v443, %v442
    %v445 = vmul.f32 0.5, %v444
    %v446 = vsub.f32 1.5, %v445
    %v447 = vmul.f32 %v442, %v446
    %vm448 = vweird.f32 %v291
    %vm449 = vweird.f32 %v442
    %vm450 = vmor %vm448, %vm449
    %v451 = vsel %vm450, %v442, %v447
    %v452 = vmul.f32 %v189, %v301
    %v453 = vmul.f32 %v191, %v311
    %v454 = vmul.f32 %v194, %v321
    %v455 = vmul.f32 %v196, %v331
    %v456 = vmul.f32 %v199, %v341
    %v457 = vmul.f32 %v201, %v351
    %v458 = vmul.f32 %v204, %v361
    %v459 = vmul.f32 %v206, %v371
    %v460 = vmul.f32 %v209, %v381
    %v461 = vmul.f32 %v211, %v391
    %v462 = vmul.f32 %v214, %v401
    %v463 = vmul.f32 %v216, %v411
    %v464 = vmul.f32 %v219, %v421
    %v465 = vmul.f32 %v221, %v431
    %v466 = vmul.f32 %v224, %v441
    %v467 = vmul.f32 %v226, %v451
    %468 = vxpose.xlu0.b32.start [1/16] %v452, 128
    %469 = vxpose.xlu0.b32.cont [2/16] %v453, 128
    %470 = vxpose.xlu0.b32.cont [3/16] %v454, 128
    %471 = vxpose.xlu0.b32.cont [4/16] %v455, 128
    %472 = vxpose.xlu0.b32.cont [5/16] %v456, 128
    %473 = vxpose.xlu0.b32.cont [6/16] %v457, 128
    %474 = vxpose.xlu0.b32.cont [7/16] %v458, 128
    %475 = vxpose.xlu0.b32.cont [8/16] %v459, 128
    %476 = vxpose.xlu0.b32.cont [9/16] %v460, 128
    %477 = vxpose.xlu0.b32.cont [10/16] %v461, 128
    %478 = vxpose.xlu0.b32.cont [11/16] %v462, 128
    %479 = vxpose.xlu0.b32.cont [12/16] %v463, 128
    %480 = vxpose.xlu0.b32.cont [13/16] %v464, 128
    %481 = vxpose.xlu0.b32.cont [14/16] %v465, 128
    %482 = vxpose.xlu0.b32.cont [15/16] %v466, 128
    %483 = vxpose.xlu0.b32.end [16/16] %v467, 128
    %v484 = vpop.trf.xlu0
    %v485 = vpop.trf.xlu0
    %v486 = vpop.trf.xlu0
    %v487 = vpop.trf.xlu0
    %v488 = vpop.trf.xlu0
    %v489 = vpop.trf.xlu0
    %v490 = vpop.trf.xlu0
    %v491 = vpop.trf.xlu0
    %v492 = vpop.trf.xlu0
    %v493 = vpop.trf.xlu0
    %v494 = vpop.trf.xlu0
    %v495 = vpop.trf.xlu0
    %v496 = vpop.trf.xlu0
    %v497 = vpop.trf.xlu0
    %v498 = vpop.trf.xlu0
    %v499 = vpop.trf.xlu0
    %v500 = vpack.c.bf16 %v484, %v484
    %v501 = vpack.c.bf16 %v485, %v485
    %v502 = vpack.c.bf16 %v486, %v486
    %v503 = vpack.c.bf16 %v487, %v487
    %v504 = vpack.c.bf16 %v488, %v488
    %v505 = vpack.c.bf16 %v489, %v489
    %v506 = vpack.c.bf16 %v490, %v490
    %v507 = vpack.c.bf16 %v491, %v491
    %v508 = vpack.c.bf16 %v492, %v492
    %v509 = vpack.c.bf16 %v493, %v493
    %v510 = vpack.c.bf16 %v494, %v494
    %v511 = vpack.c.bf16 %v495, %v495
    %v512 = vpack.c.bf16 %v496, %v496
    %v513 = vpack.c.bf16 %v497, %v497
    %v514 = vpack.c.bf16 %v498, %v498
    %v515 = vpack.c.bf16 %v499, %v499
    %516 = vst [vmem:[#allocation7] sm:$0xf] %v500
    %517 = vst [vmem:[#allocation7 + $0x4] sm:$0xf] %v501
    %518 = vst [vmem:[#allocation7 + $0x8] sm:$0xf] %v502
    %519 = vst [vmem:[#allocation7 + $0xc] sm:$0xf] %v503
    %520 = vst [vmem:[#allocation7 + $0x10] sm:$0xf] %v504
    %521 = vst [vmem:[#allocation7 + $0x14] sm:$0xf] %v505
    %522 = vst [vmem:[#allocation7 + $0x18] sm:$0xf] %v506
    %523 = vst [vmem:[#allocation7 + $0x1c] sm:$0xf] %v507
    %524 = vst [vmem:[#allocation7 + $0x20] sm:$0xf] %v508
    %525 = vst [vmem:[#allocation7 + $0x24] sm:$0xf] %v509
    %526 = vst [vmem:[#allocation7 + $0x28] sm:$0xf] %v510
    %527 = vst [vmem:[#allocation7 + $0x2c] sm:$0xf] %v511
    %528 = vst [vmem:[#allocation7 + $0x30] sm:$0xf] %v512
    %529 = vst [vmem:[#allocation7 + $0x34] sm:$0xf] %v513
    %530 = vst [vmem:[#allocation7 + $0x38] sm:$0xf] %v514
    %531 = vst [vmem:[#allocation7 + $0x3c] sm:$0xf] %v515
    // Predicated region
    $region22: #{tpu_custom_call.1} parent=1 // pred_check
      _
    $region23: #{tpu_custom_call.1} parent=1 // pred_check_branch
      %533 = sbr.rel (0) target = $region25
    $region24: #{tpu_custom_call.1} parent=1 // pred_region
      %535 = vsyncadd [#allocation4], 0
      %s536 = sshll.u32 [#allocation7], 4
      %s537 = int_to_ptr.vmem [resolvable:$true] %s536
      %s538 = sshll.u32 %s3, 4
      %s539 = int_to_ptr.hbm [resolvable:$true] %s538
      %544 = dma.vmem_to_hbm [thread:$0]  %s537, 1024, %s539, [#allocation4], 64, 64, 4
    $region25: #{tpu_custom_call.1} parent=1 // pred_fallthru
      _
    // Predicated region
    $region26: #{tpu_custom_call.1} parent=1 // pred_check
      _
    $region27: #{tpu_custom_call.1} parent=1 // pred_check_branch
      %546 = sbr.rel (0) target = $region29
    $region28: #{tpu_custom_call.1} parent=1 // pred_region
      %548 = dma.done [#allocation4], 1024
    $region29: #{tpu_custom_call.1} parent=1 // pred_fallthru
      _
    %549 = vsyncpa [#allocation3], 1
    %550 = vsyncpa [#allocation6], 1
    %551 = vsyncpa [#allocation4], 1

</llo_original>
